<compile_context>
chip_gen: v6e
topology: v6e:2x2x1
jax: 0.10.0
libtpu: 0.0.40
codegen_flags: <defaults>
</compile_context>

<pallas_src>
import jax
import jax.numpy as jnp
from jax import lax
from jax.experimental import pallas as pl
from jax.experimental.pallas import tpu as pltpu


def _gate_conv_kernel(p_ref, w_ref, b_ref, o_ref):
    # p_ref : (1, K_pad, tm)       im2col patches tile (lanes = output positions)
    # w_ref : (2*C_out, K_pad)     stacked conv weight (out rows, then gate rows)
    # b_ref : (2*C_out, 1)         bias, f32
    # o_ref : (1, C_out, tm)       gated output tile (lane-dense)
    c_out = o_ref.shape[1]
    p = p_ref[0]                                                   # (K_pad, tm)
    y = jnp.dot(w_ref[...], p, preferred_element_type=jnp.float32)  # (2*C_out, tm)
    y = y + b_ref[...]                                             # f32 math
    out = y[:c_out]            # sublane-axis split; 8-aligned when C_out % 8 == 0
    gate = y[c_out:]
    # TODO(synk): on v5e, 1/(1+exp(-gate)) with pl.reciprocal(approx=True) moves
    # the divide to the EUP slot; kept exact sigmoid here for tight tolerances.
    o_ref[0] = (out * jax.nn.sigmoid(gate)).astype(o_ref.dtype)


def gate_conv2d(x, weight, bias, kernel_size, stride, *, tm=2048,
                compute_dtype=None):
    """GateConv2d forward.

    x:      (B, C_in, T, F) float32 (NCHW, like PyTorch); 3-D input is unsqueezed.
    weight: (2*C_out, C_in, k_t, k_f)
    bias:   (2*C_out,)
    returns (B, C_out, T_out, F_out)
    """
    if x.ndim == 3:
        x = x[:, None]                                   # match PyTorch unsqueeze
    k_t, k_f = kernel_size
    s_t, s_f = stride
    B, C_in, T, F = x.shape
    two_cout = weight.shape[0]
    c_out = two_cout // 2
    out_dtype = x.dtype
    if compute_dtype is None:
        compute_dtype = x.dtype

    # Causal pad along time (ConstantPad2d((0, 0, k_t - 1, 0), 0.0)).
    if k_t > 1:
        x = jnp.pad(x, ((0, 0), (0, 0), (k_t - 1, 0), (0, 0)))
    T_pad = x.shape[2]
    T_out = (T_pad - k_t) // s_t + 1
    F_out = (F - k_f) // s_f + 1
    K = C_in * k_t * k_f
    M = T_out * F_out

    # im2col, built directly in the (B, K, M) layout the kernel consumes.
    # K ordered (c_in, k_t, k_f) to match the flattened OIHW weight; M is the
    # lane axis.  No padding of M — partial edge blocks are clipped by Pallas.
    slabs = []
    for it in range(k_t):
        for jf in range(k_f):
            slabs.append(
                x[:, :, it:it + s_t * T_out:s_t, jf:jf + s_f * F_out:s_f])
    patches = jnp.stack(slabs, axis=2).reshape(B, K, M).astype(compute_dtype)

    # Stacked weight / bias (single dot in-kernel; split on the sublane axis).
    w_flat = weight.reshape(two_cout, K).astype(compute_dtype)
    b_col = bias.reshape(two_cout, 1).astype(jnp.float32)

    # Sub-32-bit packing: pad K so the (K, tm) block's sublane dim is a packed
    # multiple (e.g. 24 -> 32 for bf16) with zeros instead of wasted DMA bytes.
    itemsize = jnp.dtype(compute_dtype).itemsize
    if itemsize < 4:
        k_align = 8 * (4 // itemsize)
        K_pad = ((K + k_align - 1) // k_align) * k_align
        if K_pad != K:
            patches = jnp.pad(patches, ((0, 0), (0, K_pad - K), (0, 0)))
            w_flat = jnp.pad(w_flat, ((0, 0), (0, K_pad - K)))
    else:
        K_pad = K

    # M-tile: multiple of 128, as large as useful (amortize ~0.35us/step).
    m_ceil = ((M + 127) // 128) * 128
    tm = max(128, min((tm // 128) * 128, m_ceil))
    if B == 1 and M > 128:
        # v7x has 2 TensorCores: keep >= 2 M-tiles when B gives no parallelism.
        half = (((M + 1) // 2) + 127) // 128 * 128
        tm = min(tm, half)
    n_m = (M + tm - 1) // tm

    # Multi-buffer the streamed patches input when the grid is long enough.
    if B * n_m >= 3:
        patch_spec = pl.BlockSpec((1, K_pad, tm), lambda b, m: (b, 0, m),
                                  pipeline_mode=pl.Buffered(3))
    else:
        patch_spec = pl.BlockSpec((1, K_pad, tm), lambda b, m: (b, 0, m))

    cost = pl.CostEstimate(
        flops=int(2 * B * M * K * two_cout),
        transcendentals=int(B * c_out * M),
        bytes_accessed=int(patches.size * itemsize + w_flat.size * itemsize
                           + b_col.size * 4
                           + B * c_out * M * jnp.dtype(out_dtype).itemsize),
    )

    out_flat = pl.pallas_call(
        _gate_conv_kernel,
        out_shape=jax.ShapeDtypeStruct((B, c_out, M), out_dtype),
        grid_spec=pltpu.PrefetchScalarGridSpec(
            num_scalar_prefetch=0,
            grid=(B, n_m),
            in_specs=[
                patch_spec,
                pl.BlockSpec((two_cout, K_pad), lambda b, m: (0, 0)),
                pl.BlockSpec((two_cout, 1), lambda b, m: (0, 0)),
            ],
            out_specs=pl.BlockSpec((1, c_out, tm), lambda b, m: (b, 0, m)),
        ),
        compiler_params=pltpu.CompilerParams(
            dimension_semantics=("parallel", "parallel")),
        cost_estimate=cost,
    )(patches, w_flat, b_col)

    return out_flat.reshape(B, c_out, T_out, F_out)       # NCHW, free reshape


def _reference(x, weight, bias, kernel_size, stride):
    """Pure-JAX reference (mirrors the PyTorch forward)."""
    k_t, _ = kernel_size
    if k_t > 1:
        x = jnp.pad(x, ((0, 0), (0, 0), (k_t - 1, 0), (0, 0)))
    y = lax.conv_general_dilated(
        x, weight, window_strides=stride, padding="VALID",
        dimension_numbers=("NCHW", "OIHW", "NCHW"),
    ) + bias.reshape(1, -1, 1, 1)
    c_out = weight.shape[0] // 2
    out, gate = y[:, :c_out], y[:, c_out:]
    return out * jax.nn.sigmoid(gate)


if __name__ == "__main__":
    # Small, GaGNet-like configuration.
    B, C_in, T, F = 2, 4, 16, 16
    C_out = 8
    kernel_size = (2, 3)     # (k_t, k_f) -> causal pad of k_t-1 along time
    stride = (1, 2)

    key = jax.random.PRNGKey(0)
    kx, kw, kb = jax.random.split(key, 3)
    x = jax.random.normal(kx, (B, C_in, T, F), dtype=jnp.float32)
    fan_in = C_in * kernel_size[0] * kernel_size[1]
    bound = 1.0 / (fan_in ** 0.5)
    weight = jax.random.uniform(
        kw, (2 * C_out, C_in, kernel_size[0], kernel_size[1]),
        minval=-bound, maxval=bound, dtype=jnp.float32)
    bias = jax.random.uniform(
        kb, (2 * C_out,), minval=-bound, maxval=bound, dtype=jnp.float32)

    ref = _reference(x, weight, bias, kernel_size, stride)

    # f32 path (exact match to the reference).
    out = gate_conv2d(x, weight, bias, kernel_size, stride)
    out = jax.block_until_ready(out)
    assert out.shape == ref.shape, (out.shape, ref.shape)
    assert jnp.allclose(out, ref, atol=1e-5, rtol=1e-5), float(
        jnp.max(jnp.abs(out - ref)))

    # bf16 matmul path (reduced DMA bytes; f32 accumulation + gating).
    # bf16 quantizes patches and weights before the MXU -> loose tolerance.
    out_bf16 = gate_conv2d(x, weight, bias, kernel_size, stride,
                           compute_dtype=jnp.bfloat16)
    out_bf16 = jax.block_until_ready(out_bf16)
    assert jnp.allclose(out_bf16, ref, atol=1e-1, rtol=1e-1), float(
        jnp.max(jnp.abs(out_bf16 - ref)))

    print("KERNEL_OK")
</pallas_src>

<mosaic_0001>
module attributes {stable_mosaic.version = 11 : i64} {
  func.func @_gate_conv_kernel(%arg0: i32, %arg1: i32, %arg2: memref<1x24x128xf32, #tpu.memory_space<vmem>>, %arg3: memref<16x24xf32, #tpu.memory_space<vmem>>, %arg4: memref<16x1xf32, #tpu.memory_space<vmem>>, %arg5: memref<1x8x128xf32, #tpu.memory_space<vmem>>) attributes {dimension_semantics = [#tpu.dimension_semantics<parallel>, #tpu.dimension_semantics<parallel>], iteration_bounds = array<i64: 2, 1>, scalar_prefetch = 0 : i64, scratch_operands = 0 : i64, tpu.core_type = #tpu.core_type<tc>, window_params = [{transform_indices = @transform_0, window_bounds = array<i64: 1, 24, 128>}, {pipeline_mode = #tpu.pipeline_mode<synchronous>, transform_indices = @transform_1, window_bounds = array<i64: 16, 24>}, {pipeline_mode = #tpu.pipeline_mode<synchronous>, transform_indices = @transform_2, window_bounds = array<i64: 16, 1>}, {transform_indices = @transform_3, window_bounds = array<i64: 1, 8, 128>}]} {
    %c0 = arith.constant 0 : index
    %c0_0 = arith.constant 0 : index
    %c0_1 = arith.constant 0 : index
    %0 = vector.load %arg2[%c0, %c0_0, %c0_1] : memref<1x24x128xf32, #tpu.memory_space<vmem>>, vector<1x24x128xf32>
    %1 = vector.shape_cast %0 : vector<1x24x128xf32> to vector<24x128xf32>
    %c0_2 = arith.constant 0 : index
    %c0_3 = arith.constant 0 : index
    %2 = vector.load %arg3[%c0_2, %c0_3] : memref<16x24xf32, #tpu.memory_space<vmem>>, vector<16x24xf32>
    %cst = arith.constant dense<0.000000e+00> : vector<16x128xf32>
    %3 = tpu.matmul %2, %1, %cst {dimension_numbers = #tpu.dot_dimension_numbers<[1], [0], [0], [1], [0, 0, 1, 1], [], []>} : vector<16x24xf32>, vector<24x128xf32>, vector<16x128xf32> -> vector<16x128xf32>
    %c0_4 = arith.constant 0 : index
    %c0_5 = arith.constant 0 : index
    %4 = vector.load %arg4[%c0_4, %c0_5] : memref<16x1xf32, #tpu.memory_space<vmem>>, vector<16x1xf32>
    %5 = vector.broadcast %4 : vector<16x1xf32> to vector<16x128xf32>
    %6 = arith.addf %3, %5 : vector<16x128xf32>
    %7 = vector.extract_strided_slice %6 {offsets = [0, 0], sizes = [8, 128], strides = [1, 1]} : vector<16x128xf32> to vector<8x128xf32>
    %8 = vector.extract_strided_slice %6 {offsets = [8, 0], sizes = [8, 128], strides = [1, 1]} : vector<16x128xf32> to vector<8x128xf32>
    %9 = arith.negf %8 : vector<8x128xf32>
    %10 = math.exp %9 : vector<8x128xf32>
    %cst_6 = arith.constant 1.000000e+00 : f32
    %11 = vector.broadcast %cst_6 : f32 to vector<8x128xf32>
    %12 = arith.addf %11, %10 : vector<8x128xf32>
    %13 = arith.divf %11, %12 : vector<8x128xf32>
    %14 = arith.mulf %7, %13 : vector<8x128xf32>
    %c0_7 = arith.constant 0 : index
    %c0_8 = arith.constant 0 : index
    %c0_9 = arith.constant 0 : index
    %15 = vector.load %arg5[%c0_7, %c0_8, %c0_9] : memref<1x8x128xf32, #tpu.memory_space<vmem>>, vector<1x8x128xf32>
    %16 = vector.shape_cast %15 : vector<1x8x128xf32> to vector<8x128xf32>
    %17 = vector.shape_cast %14 : vector<8x128xf32> to vector<1x8x128xf32>
    tpu.vector_store %arg5[%c0_7, %c0_8, %c0_9], %17 {strides = array<i32>} : memref<1x8x128xf32, #tpu.memory_space<vmem>>, vector<1x8x128xf32>,
    return
  }
  func.func @transform_0(%arg0: i32, %arg1: i32) -> (i32, i32, i32) {
    %c0_i32 = arith.constant 0 : i32
    %c0_i32_0 = arith.constant 0 : i32
    return %arg0, %c0_i32, %arg1 : i32, i32, i32
  }
  func.func @transform_1(%arg0: i32, %arg1: i32) -> (i32, i32) {
    %c0_i32 = arith.constant 0 : i32
    %c0_i32_0 = arith.constant 0 : i32
    %c0_i32_1 = arith.constant 0 : i32
    return %c0_i32, %c0_i32_0 : i32, i32
  }
  func.func @transform_2(%arg0: i32, %arg1: i32) -> (i32, i32) {
    %c0_i32 = arith.constant 0 : i32
    %c0_i32_0 = arith.constant 0 : i32
    %c0_i32_1 = arith.constant 0 : i32
    return %c0_i32, %c0_i32_0 : i32, i32
  }
  func.func @transform_3(%arg0: i32, %arg1: i32) -> (i32, i32, i32) {
    %c0_i32 = arith.constant 0 : i32
    %c0_i32_0 = arith.constant 0 : i32
    return %arg0, %c0_i32, %arg1 : i32, i32, i32
  }
}

</mosaic_0001>

<llo_original>
// kernel: tpu_custom_call.1
$region0: #{tpu_custom_call.1}
  #allocation0 [shape = 'u32[]', space=smem, size = 0x4, offset = 0x4, fixed_abs, tag = 'smem constant byte address 0x4 - core index']
  #allocation1 [shape = 'u32[144,128]{1,0:T(1,128)}', space=vmem, size = 0x12000, scoped, tag = 'internal scratch']
  %s0 = inlined_call_operand.hbm [shape: f32[2,24,112], index: 0, kind: input, shape index: {}]
  %s1 = inlined_call_operand.vmem [shape: f32[16,24], index: 1, kind: input, shape index: {}]
  %s2 = inlined_call_operand.vmem [shape: f32[16,1], index: 2, kind: input, shape index: {}]
  %s3 = inlined_call_operand.hbm [shape: f32[2,8,112], index: 3, kind: output, shape index: {}]
  %s4 = sld [smem:[#allocation0]]
  $region49: #{tpu_custom_call.1} parent=0
    _
  %s6 = ssub.s32 1, %s4
  %s7 = scalar_select 0, %s6, %s4
  $region1: #{tpu_custom_call.1} parent=0
    #allocation2 [shape = 'u8[24576]{0}', space=vmem, size = 0x6000, scoped, tag = 'input window, operand 0']
    #allocation3 [shape = 's32[2]{0}', space=sflag, size = 0x8, scoped, tag = 'scoped memory for tpu_custom_call.1']
    #allocation4 [shape = 's32[2]{0}', space=sflag, size = 0x8, scoped, tag = 'scoped memory for tpu_custom_call.1']
    #allocation5 [shape = 'u8[8192]{0}', space=vmem, size = 0x2000, scoped, tag = 'output window, operand 0']
    %8 = vsyncpa [#allocation3], 0
    %s9 = scalar_lea.sflag [#allocation3], 1
    %10 = vsyncpa %s9, 0
    %11 = vsyncpa [#allocation4], 0
    %s12 = scalar_lea.sflag [#allocation4], 1
    %13 = vsyncpa %s12, 0
    loop: start=0, step=1, limit=4
    $region2: #{tpu_custom_call.1} parent=1 // loop_pre_header
      _
    $region3: #{tpu_custom_call.1} parent=1 // loop_header
      %s15 = sphi 0, %s19
      %p16 = scmp.ge.s32.totalorder %s15, 4
      %s22 = sphi 0, %s34
      %s23 = sphi 0, %s30
      %s24 = sphi 0, %s22
      %s25 = sphi 0, %s23
      %s26 = sphi 0, %s24
      %s27 = sphi 0, %s25
      %s39 = sphi 0, %s41
      %s42 = sphi 0, %s39
      %s43 = sphi 0, %s42
      %s59 = sphi 0, %s43
      %s63 = sphi 0, %s63
      %s65 = sphi 0, %s63
      %s66 = sphi 0, %s65
      %s80 = sphi 0, %s66
      %s84 = sphi 0, %s84
      %s86 = sphi 0, %s84
      %s87 = sphi 0, %s86
      %s101 = sphi 0, %s87
      %s109 = sphi 0, %s111
      %s112 = sphi 0, %s109
      %s113 = sphi 0, %s112
      %s129 = sphi 0, %s113
    $region4: #{tpu_custom_call.1} parent=1 // loop_header_branch
      %18 = sbr.rel (%p16) target = $region8
    $region5: #{tpu_custom_call.1} parent=1 // loop_body
      %s20 = ssub.s32 %s15, 1
      %s21 = ssub.s32 %s15, 2
      %s28 = sadd.s32 1, %s23
      %p29 = scmp.ge.s32.totalorder %s28, 1
      %s30 = scalar_select %p29, 0, %s28
      %s31 = sadd.s32 1, %s22
      %s32 = scalar_select %p29, %s31, %s22
      %p33 = scmp.ge.s32.totalorder %s32, 2
      %s34 = scalar_select %p33, 0, %s32
      %s35 = ssub.s32 %s22, %s34
      %s36 = ssub.s32 %s23, %s30
      %s37 = sor.u32 %s35, %s36
      %p38 = scmp.eq.s32.totalorder %s37, 0
      %s40 = sadd.s32 %s39, 1
      %s41 = scalar_select %p38, %s39, %s40
      %p44 = pneg %p38
      %p45 = scmp.eq.s32.totalorder %s15, 1
      %p46 = por %p44, %p45
      %p47 = scmp.ne.s32.totalorder %s39, %s42
      %p48 = scmp.eq.s32.totalorder %s15, 0
      %p49 = por %p47, %p48
      %p50 = scmp.ne.s32.totalorder %s39, %s42
      %p51 = scmp.eq.s32.totalorder %s20, 1
      %p52 = por %p50, %p51
      %p53 = scmp.ne.s32.totalorder %s42, %s43
      %p54 = scmp.eq.s32.totalorder %s20, 0
      %p55 = por %p53, %p54
      %p56 = scmp.ne.s32.totalorder %s42, %s43
      %p57 = scmp.eq.s32.totalorder %s21, 1
      %p58 = por %p56, %p57
      %p60 = scmp.ne.s32.totalorder %s43, %s59
      %p61 = scmp.eq.s32.totalorder %s21, 0
      %p62 = por %p60, %p61
      %s64 = sadd.s32 %s63, 1
      %p67 = scmp.eq.s32.totalorder %s15, 1
      %p68 = scmp.ne.s32.totalorder %s63, %s65
      %p69 = scmp.eq.s32.totalorder %s15, 0
      %p70 = por %p68, %p69
      %p71 = scmp.ne.s32.totalorder %s63, %s65
      %p72 = scmp.eq.s32.totalorder %s20, 1
      %p73 = por %p71, %p72
      %p74 = scmp.ne.s32.totalorder %s65, %s66
      %p75 = scmp.eq.s32.totalorder %s20, 0
      %p76 = por %p74, %p75
      %p77 = scmp.ne.s32.totalorder %s65, %s66
      %p78 = scmp.eq.s32.totalorder %s21, 1
      %p79 = por %p77, %p78
      %p81 = scmp.ne.s32.totalorder %s66, %s80
      %p82 = scmp.eq.s32.totalorder %s21, 0
      %p83 = por %p81, %p82
      %s85 = sadd.s32 %s84, 1
      %p88 = scmp.eq.s32.totalorder %s15, 1
      %p89 = scmp.ne.s32.totalorder %s84, %s86
      %p90 = scmp.eq.s32.totalorder %s15, 0
      %p91 = por %p89, %p90
      %p92 = scmp.ne.s32.totalorder %s84, %s86
      %p93 = scmp.eq.s32.totalorder %s20, 1
      %p94 = por %p92, %p93
      %p95 = scmp.ne.s32.totalorder %s86, %s87
      %p96 = scmp.eq.s32.totalorder %s20, 0
      %p97 = por %p95, %p96
      %p98 = scmp.ne.s32.totalorder %s86, %s87
      %p99 = scmp.eq.s32.totalorder %s21, 1
      %p100 = por %p98, %p99
      %p102 = scmp.ne.s32.totalorder %s87, %s101
      %p103 = scmp.eq.s32.totalorder %s21, 0
      %p104 = por %p102, %p103
      %s105 = ssub.s32 %s22, %s34
      %s106 = ssub.s32 %s23, %s30
      %s107 = sor.u32 %s105, %s106
      %p108 = scmp.eq.s32.totalorder %s107, 0
      %s110 = sadd.s32 %s109, 1
      %s111 = scalar_select %p108, %s109, %s110
      %p114 = pneg %p108
      %p115 = scmp.eq.s32.totalorder %s15, 1
      %p116 = por %p114, %p115
      %p117 = scmp.ne.s32.totalorder %s109, %s112
      %p118 = scmp.eq.s32.totalorder %s15, 0
      %p119 = por %p117, %p118
      %p120 = scmp.ne.s32.totalorder %s109, %s112
      %p121 = scmp.eq.s32.totalorder %s20, 1
      %p122 = por %p120, %p121
      %p123 = scmp.ne.s32.totalorder %s112, %s113
      %p124 = scmp.eq.s32.totalorder %s20, 0
      %p125 = por %p123, %p124
      %p126 = scmp.ne.s32.totalorder %s112, %s113
      %p127 = scmp.eq.s32.totalorder %s21, 1
      %p128 = por %p126, %p127
      %p130 = scmp.ne.s32.totalorder %s113, %s129
      %p131 = scmp.eq.s32.totalorder %s21, 0
      %p132 = por %p130, %p131
      %p133 = scmp.le.s32.totalorder 1, %s15
      %p134 = scmp.lt.s32.totalorder %s15, 3
      %p135 = pnand %p133, %p134
      %p136 = pneg %p135
      // Predicated region
      $region9: #{tpu_custom_call.1} parent=5 // pred_check
        _
      $region10: #{tpu_custom_call.1} parent=5 // pred_check_branch
        %138 = sbr.rel (%p135) target = $region12
      $region11: #{tpu_custom_call.1} parent=5 // pred_region
        %s139 = ssub.s32 %s15, 1
        // Predicated region
        $region13: #{tpu_custom_call.1} parent=11 // pred_check
          %p140 = pneg %p76
        $region14: #{tpu_custom_call.1} parent=11 // pred_check_branch
          %142 = sbr.rel (%p140) target = $region16
        $region15: #{tpu_custom_call.1} parent=11 // pred_region
          _
        $region16: #{tpu_custom_call.1} parent=11 // pred_fallthru
          _
        // Predicated region
        $region17: #{tpu_custom_call.1} parent=11 // pred_check
          %p143 = pneg %p97
        $region18: #{tpu_custom_call.1} parent=11 // pred_check_branch
          %145 = sbr.rel (%p143) target = $region20
        $region19: #{tpu_custom_call.1} parent=11 // pred_region
          _
        $region20: #{tpu_custom_call.1} parent=11 // pred_fallthru
          _
      $region12: #{tpu_custom_call.1} parent=5 // pred_fallthru
        _
      %p146 = scmp.lt.s32.totalorder %s15, 2
      // Predicated region
      $region21: #{tpu_custom_call.1} parent=5 // pred_check
        %p147 = pneg %p146
      $region22: #{tpu_custom_call.1} parent=5 // pred_check_branch
        %149 = sbr.rel (%p147) target = $region24
      $region23: #{tpu_custom_call.1} parent=5 // pred_region
        // Predicated region
        $region25: #{tpu_custom_call.1} parent=23 // pred_check
          %p150 = pneg %p49
        $region26: #{tpu_custom_call.1} parent=23 // pred_check_branch
          %152 = sbr.rel (%p150) target = $region28
        $region27: #{tpu_custom_call.1} parent=23 // pred_region
          %s153 = sand.u32 %s39, 1
          %s154 = scalar_lea.sflag [#allocation3], %s153
          %s155 = sand.u32 %s39, 1
          %s156 = smul.addr %s155, 24
          %s157 = scalar_lea.vmem [#allocation2], %s156
          %s159 = ssub.s32 384, 384
          %160 = vsyncadd %s154, %s159
          %s161 = smul.addr %s22, 3
          %s162 = sadd.s32 %s23, %s161
          %s163 = smul.addr %s162, 128
          %s164 = scalar_lea.hbm %s0, %s163
          %s165 = sshll.u32 %s157, 4
          %s166 = int_to_ptr.vmem [resolvable:$true] %s165
          %171 = dma.hbm_to_vmem [thread:$0]  %s164, 384, %s166, %s154, 128, 128, 8
        $region28: #{tpu_custom_call.1} parent=23 // pred_fallthru
          _
      $region24: #{tpu_custom_call.1} parent=5 // pred_fallthru
        _
      %p172 = scmp.le.s32.totalorder 1, %s15
      %p173 = scmp.lt.s32.totalorder %s15, 3
      %p174 = pnand %p172, %p173
      %p175 = pneg %p174
      // Predicated region
      $region29: #{tpu_custom_call.1} parent=5 // pred_check
        _
      $region30: #{tpu_custom_call.1} parent=5 // pred_check_branch
        %177 = sbr.rel (%p174) target = $region32
      $region31: #{tpu_custom_call.1} parent=5 // pred_region
        %s178 = ssub.s32 %s15, 1
        %s179 = sand.u32 %s42, 1
        %s180 = scalar_lea.sflag [#allocation3], %s179
        %s181 = sand.u32 %s42, 1
        %s182 = smul.addr %s181, 24
        %s183 = scalar_lea.vmem [#allocation2], %s182
        // Predicated region
        $region33: #{tpu_custom_call.1} parent=31 // pred_check
          %p184 = pneg %p55
        $region34: #{tpu_custom_call.1} parent=31 // pred_check_branch
          %186 = sbr.rel (%p184) target = $region36
        $region35: #{tpu_custom_call.1} parent=31 // pred_region
          %187 = dma.done %s180, 384
        $region36: #{tpu_custom_call.1} parent=31 // pred_fallthru
          _
        %s188 = sand.u32 %s42, 1
        %s189 = scalar_lea.sflag [#allocation3], %s188
        %s190 = sand.u32 %s42, 1
        %s191 = smul.addr %s190, 24
        %s192 = scalar_lea.vmem [#allocation2], %s191
        %p193 = pneg %p55
        %p194 = pneg %p52
        %p195 = pneg %p76
        %p196 = pneg %p73
        %p197 = pneg %p97
        %p198 = pneg %p94
        %p199 = pneg %p125
        %p200 = pneg %p122
        %s201 = sand.u32 %s112, 1
        %s202 = scalar_lea.sflag [#allocation4], %s201
        %s203 = sand.u32 %s112, 1
        %s204 = smul.addr %s203, 8
        %s205 = scalar_lea.vmem [#allocation5], %s204
        %v206 = vld [vmem:[%s183] sm:$0xff]
        %v207 = vld [vmem:[%s183 + $0x8] sm:$0xff]
        %v208 = vld [vmem:[%s183 + $0x10] sm:$0xff]
        %v209 = vld [vmem:[%s1] sm:$0xff]
        %v210 = vld [vmem:[%s1 + $0x8] sm:$0xff]
        %v211 = vld [vmem:[%s2] sm:$0xff]
        %v212 = vld [vmem:[%s2 + $0x8] sm:$0xff]
        %214 = vset.pattern.permute.xlu0 0
        %215 = vperm.xlu0 %214, %v211
        %v216 = vpop.permute.xlu0 %215
        %219 = vset.pattern.permute.xlu0 0
        %220 = vperm.xlu0 %219, %v212
        %v221 = vpop.permute.xlu0 %220
        %vm223 = vcmask 195584
        %v225 = vsel %vm223, %v209, 0
        %v228 = vsel %vm223, %v210, 0
        %230 = vmatprep.subr.mxu0 0.0
        %231 = vmatpush1.msra.mxu0 0.0
        %232 = vmatprep.subr.mxu0 0.0
        %233 = vmatpush1.msra.mxu0 0.0
        %234 = vmatprep.subr.mxu0 0.0
        %235 = vmatpush1.msra.mxu0 0.0
        %236 = vmatprep.subr.mxu0 0.0
        %237 = vmatpush1.msra.mxu0 0.0
        %238 = vmatprep.subr.mxu0 0.0
        %239 = vmatpush1.msra.mxu0 0.0
        %240 = vmatprep.subr.mxu0 0.0
        %241 = vmatpush1.msra.mxu0 0.0
        %242 = vmatprep.subr.mxu0 0.0
        %243 = vmatpush1.msra.mxu0 0.0
        %244 = vmatprep.subr.mxu0 0.0
        %245 = vmatpush1.msra.mxu0 0.0
        %246 = vmatprep.subr.mxu0 0.0
        %247 = vmatpush1.msra.mxu0 0.0
        %248 = vmatprep.subr.mxu0 0.0
        %249 = vmatpush1.msra.mxu0 0.0
        %250 = vmatprep.subr.mxu0 0.0
        %251 = vmatpush1.msra.mxu0 0.0
        %252 = vmatprep.subr.mxu0 0.0
        %253 = vmatpush1.msra.mxu0 0.0
        %254 = vmatprep.subr.mxu0 0.0
        %255 = vmatpush1.msra.mxu0 0.0
        %256 = vmatprep.subr.mxu0 0.0
        %257 = vmatpush1.msra.mxu0 %v208
        %258 = vmatprep.subr.mxu0 0.0
        %259 = vmatpush1.msra.mxu0 %v207
        %260 = vmatprep.subr.mxu0 0.0
        %261 = vmatpush1.msra.mxu0 %v206
        %262 = vmatprep.subr.mxu0 0.0
        %263 = vmatpush2.msra.mxu0 0.0
        %264 = vmatprep.subr.mxu0 0.0
        %265 = vmatpush2.msra.mxu0 0.0
        %266 = vmatprep.subr.mxu0 0.0
        %267 = vmatpush2.msra.mxu0 0.0
        %268 = vmatprep.subr.mxu0 0.0
        %269 = vmatpush2.msra.mxu0 0.0
        %270 = vmatprep.subr.mxu0 0.0
        %271 = vmatpush2.msra.mxu0 0.0
        %272 = vmatprep.subr.mxu0 0.0
        %273 = vmatpush2.msra.mxu0 0.0
        %274 = vmatprep.subr.mxu0 0.0
        %275 = vmatpush2.msra.mxu0 0.0
        %276 = vmatprep.subr.mxu0 0.0
        %277 = vmatpush2.msra.mxu0 0.0
        %278 = vmatprep.subr.mxu0 0.0
        %279 = vmatpush2.msra.mxu0 0.0
        %280 = vmatprep.subr.mxu0 0.0
        %281 = vmatpush2.msra.mxu0 0.0
        %282 = vmatprep.subr.mxu0 0.0
        %283 = vmatpush2.msra.mxu0 0.0
        %284 = vmatprep.subr.mxu0 0.0
        %285 = vmatpush2.msra.mxu0 0.0
        %286 = vmatprep.subr.mxu0 0.0
        %287 = vmatpush2.msra.mxu0 0.0
        %288 = vmatprep.subr.mxu0 0.0
        %289 = vmatpush2.msra.mxu0 0.0
        %290 = vmatprep.subr.mxu0 0.0
        %291 = vmatpush2.msra.mxu0 0.0
        %292 = vmatprep.subr.mxu0 0.0
        %293 = vmatpush2.msra.mxu0 0.0
        %294 = vmatprep.mubr.f32.mxu0 0.0
        %295 = vmatmul.mubr.f32.gmra.mxu0 %v225
        %v296 = vpop.f32.mrf.mxu0
        %v297 = vadd.f32 %v216, %v296
        %v298 = vpop.f32.mrf.mxu0
        %299 = vmatprep.mubr.f32.mxu0 0.0
        %300 = vmatmul.mubr.f32.gmra.mxu0 %v228
        %v301 = vpop.f32.mrf.mxu0
        %v302 = vadd.f32 %v221, %v301
        %v303 = vpop.f32.mrf.mxu0
        %304 = vdwg.mxu0
        %v305 = vxor.u32 %v302, 2147483648
        %v306 = vmul.f32 %v305, 1.442695
        %v307 = vpow.pop %v306
        %v308 = vadd.f32 %v307, 1.0
        %v309 = vrcp.pop %v308
        %v310 = vmul.f32 1.0, %v309
        %v311 = vmul.f32 %v297, %v310
        %312 = vst [vmem:[%s205] sm:$0xff] %v311
        %s313 = sand.u32 %s112, 1
        %s314 = scalar_lea.sflag [#allocation4], %s313
        %s315 = sand.u32 %s112, 1
        %s316 = smul.addr %s315, 8
        %s317 = scalar_lea.vmem [#allocation5], %s316
        // Predicated region
        $region37: #{tpu_custom_call.1} parent=31 // pred_check
          %p318 = pneg %p122
        $region38: #{tpu_custom_call.1} parent=31 // pred_check_branch
          %320 = sbr.rel (%p318) target = $region40
        $region39: #{tpu_custom_call.1} parent=31 // pred_region
          %s322 = ssub.s32 128, 128
          %323 = vsyncadd %s314, %s322
          %s324 = sadd.s32 %s25, %s24
          %s325 = smul.addr %s324, 128
          %s326 = scalar_lea.hbm %s3, %s325
          %s328 = sshll.u32 %s317, 4
          %s329 = int_to_ptr.vmem [resolvable:$true] %s328
          %331 = dma.vmem_to_hbm [thread:$0]  %s329, 128, %s326, %s314
        $region40: #{tpu_custom_call.1} parent=31 // pred_fallthru
          _
      $region32: #{tpu_custom_call.1} parent=5 // pred_fallthru
        _
      %p332 = scmp.le.s32.totalorder 2, %s15
      // Predicated region
      $region41: #{tpu_custom_call.1} parent=5 // pred_check
        %p333 = pneg %p332
      $region42: #{tpu_custom_call.1} parent=5 // pred_check_branch
        %335 = sbr.rel (%p333) target = $region44
      $region43: #{tpu_custom_call.1} parent=5 // pred_region
        %s336 = ssub.s32 %s15, 2
        // Predicated region
        $region45: #{tpu_custom_call.1} parent=43 // pred_check
          %p337 = pneg %p128
        $region46: #{tpu_custom_call.1} parent=43 // pred_check_branch
          %339 = sbr.rel (%p337) target = $region48
        $region47: #{tpu_custom_call.1} parent=43 // pred_region
          %s340 = sand.u32 %s113, 1
          %s341 = scalar_lea.sflag [#allocation4], %s340
          %s342 = sand.u32 %s113, 1
          %s343 = smul.addr %s342, 8
          %s344 = scalar_lea.vmem [#allocation5], %s343
          %345 = dma.done %s341, 128
        $region48: #{tpu_custom_call.1} parent=43 // pred_fallthru
          _
      $region44: #{tpu_custom_call.1} parent=5 // pred_fallthru
        _
    $region6: #{tpu_custom_call.1} parent=1 // loop_footer
      %s19 = sadd.s32 1, %s15
    $region7: #{tpu_custom_call.1} parent=1 // loop_footer_branch
      %14 = sbr.rel target = $region3
    $region8: #{tpu_custom_call.1} parent=1 // loop_exit
      _
    %346 = vsyncpa [#allocation3], 1
    %s347 = scalar_lea.sflag [#allocation3], 1
    %348 = vsyncpa %s347, 1
    %349 = vsyncpa [#allocation4], 1
    %s350 = scalar_lea.sflag [#allocation4], 1
    %351 = vsyncpa %s350, 1

</llo_original>
